<compile_context>
chip_gen: v5e
topology: v5e:2x2
jax: 0.10.0
libtpu: 0.0.40
codegen_flags: <defaults>
</compile_context>

<pallas_src>
import jax
import jax.numpy as jnp
from jax.experimental import pallas as pl
from jax.experimental.pallas import tpu as pltpu

EPS = 1e-5          # == MemoryNorm.variance_epsilon
_SUBLANE = 16       # bf16 packs 16 rows / vreg (also a multiple of f32's 8)

# Per-element VMEM cost of one row tile:
#   double-buffered bf16 input + output blocks : 2 bufs * 2 arrays * 2 B = 8 B
#   f32 temporaries in the body (x, x^2, normed): ~3 * 4 B           = 12 B
_BYTES_PER_ELEM = 20
_TILE_BUDGET = 24 * 1024 * 1024     # conservative vs. v7x's 64 MiB VMEM
_MAX_TILE_ROWS = 512                # ~85% of HBM BW already at 512 rows


def _round_up(x: int, m: int) -> int:
    return (x + m - 1) // m * m


def _memory_norm_kernel(x_ref, w_ref, o_ref):
    # x_ref: (tile_rows, hidden) input dtype; w_ref: (1, hidden) bf16.
    x = x_ref[...].astype(jnp.float32)
    variance = jnp.mean(x * x, axis=-1, keepdims=True)
    normed = x * jax.lax.rsqrt(variance + EPS)
    # Cast back to input dtype BEFORE multiplying by the weight (PyTorch order).
    o_ref[...] = w_ref[...] * normed.astype(x_ref.dtype)


def memory_norm(hidden_states: jax.Array, weight: jax.Array) -> jax.Array:
    """RMSNorm forward identical to MemoryNorm.forward (minus the .cpu())."""
    orig_shape = hidden_states.shape
    hidden = orig_shape[-1]
    in_dtype = hidden_states.dtype

    x2d = hidden_states.reshape(-1, hidden)
    rows = x2d.shape[0]
    w2d = weight.reshape(1, hidden)

    # --- row tile: 16-aligned, capped at 512, sized to the VMEM budget -------
    bytes_per_row = _BYTES_PER_ELEM * hidden
    tile_rows = (_TILE_BUDGET // max(bytes_per_row, 1)) // _SUBLANE * _SUBLANE
    tile_rows = max(_SUBLANE, min(tile_rows, _MAX_TILE_ROWS))
    # Aim for >= 4 grid steps on large inputs so both v7x TensorCores get work.
    tile_rows = min(tile_rows,
                    max(_SUBLANE, _round_up(pl.cdiv(rows, 4), _SUBLANE)))

    grid = (pl.cdiv(rows, tile_rows),)   # ragged last block: no padding needed

    # --- VMEM limit derived from the SAME per-step footprint ------------------
    footprint = (2 * 2 * 2 * tile_rows * hidden      # dbl-buffered bf16 in+out
                 + 3 * 4 * tile_rows * hidden        # f32 temporaries
                 + 2 * 2 * hidden)                   # weight (dbl-buffered)
    try:
        vmem_cap = pltpu.get_tpu_info().vmem_capacity_bytes
    except Exception:
        vmem_cap = 64 * 1024 * 1024                  # unknown chip -> v7x floor
    vmem_limit = int(min(vmem_cap,
                         max(16 * 1024 * 1024, footprint + 8 * 1024 * 1024)))

    out2d = pl.pallas_call(
        _memory_norm_kernel,
        out_shape=jax.ShapeDtypeStruct((rows, hidden), in_dtype),
        grid_spec=pl.GridSpec(
            grid=grid,
            in_specs=[
                pl.BlockSpec((tile_rows, hidden), lambda i: (i, 0)),
                pl.BlockSpec((1, hidden), lambda i: (0, 0)),
            ],
            out_specs=pl.BlockSpec((tile_rows, hidden), lambda i: (i, 0)),
        ),
        compiler_params=pltpu.CompilerParams(
            dimension_semantics=("parallel",),
            vmem_limit_bytes=vmem_limit,
        ),
    )(x2d, w2d)

    return out2d.reshape(orig_shape)
    # TODO(synk): the PyTorch module ends with .cpu(); the host transfer is
    # left to the caller (jax.device_get) — it has no in-kernel equivalent.


def memory_norm_ref(hidden_states: jax.Array, weight: jax.Array) -> jax.Array:
    """Pure-JAX reference mirroring the PyTorch forward."""
    input_dtype = hidden_states.dtype
    x = hidden_states.astype(jnp.float32)
    variance = jnp.mean(x * x, axis=-1, keepdims=True)
    x = x * jax.lax.rsqrt(variance + EPS)
    return weight * x.astype(input_dtype)


def _check(hidden_states, weight):
    out = jax.block_until_ready(memory_norm(hidden_states, weight))
    ref = memory_norm_ref(hidden_states, weight)
    assert out.shape == hidden_states.shape
    assert out.dtype == ref.dtype
    assert jnp.allclose(out.astype(jnp.float32), ref.astype(jnp.float32),
                        atol=2e-2, rtol=2e-2), "mismatch vs reference"


if __name__ == "__main__":
    key = jax.random.PRNGKey(0)
    k1, k2, k3, k4, k5 = jax.random.split(key, 5)

    # Primary case (matches the module's intent): batch=2, seq=8, hidden=32.
    hs = jax.random.normal(k1, (2, 8, 32), dtype=jnp.float32).astype(jnp.bfloat16)
    w = jnp.ones((32,), dtype=jnp.bfloat16)
    _check(hs, w)

    # Ragged row count + lane-exact hidden, non-trivial weight.
    hs2 = jax.random.normal(k2, (1, 5, 128), dtype=jnp.float32).astype(jnp.bfloat16)
    w2 = (1.0 + 0.1 * jax.random.normal(k3, (128,), dtype=jnp.float32)).astype(jnp.bfloat16)
    _check(hs2, w2)

    # Ragged rows (21) + hidden not a multiple of 128 (masked edge store path).
    hs3 = jax.random.normal(k4, (3, 7, 96), dtype=jnp.float32).astype(jnp.bfloat16)
    w3 = (1.0 + 0.05 * jax.random.normal(k5, (96,), dtype=jnp.float32)).astype(jnp.bfloat16)
    _check(hs3, w3)

    # Multi-step grid with a ragged last block (rows=1200 -> 4 grid steps).
    hs4 = jax.random.normal(k1, (4, 300, 256), dtype=jnp.float32).astype(jnp.bfloat16)
    w4 = jnp.ones((256,), dtype=jnp.bfloat16)
    _check(hs4, w4)

    print("KERNEL_OK")
</pallas_src>

<mosaic_0001>
module attributes {stable_mosaic.version = 11 : i64} {
  func.func @_memory_norm_kernel(%arg0: i32, %arg1: memref<16x32xbf16, #tpu.memory_space<vmem>>, %arg2: memref<1x32xbf16, #tpu.memory_space<vmem>>, %arg3: memref<16x32xbf16, #tpu.memory_space<vmem>>) attributes {dimension_semantics = [#tpu.dimension_semantics<parallel>], iteration_bounds = array<i64: 1>, scalar_prefetch = 0 : i64, scratch_operands = 0 : i64, tpu.core_type = #tpu.core_type<tc>, window_params = [{transform_indices = @transform_0, window_bounds = array<i64: 16, 32>}, {pipeline_mode = #tpu.pipeline_mode<synchronous>, transform_indices = @transform_1, window_bounds = array<i64: 1, 32>}, {transform_indices = @transform_2, window_bounds = array<i64: 16, 32>}]} {
    %c0 = arith.constant 0 : index
    %c0_0 = arith.constant 0 : index
    %0 = vector.load %arg1[%c0, %c0_0] : memref<16x32xbf16, #tpu.memory_space<vmem>>, vector<16x32xbf16>
    %1 = arith.extf %0 : vector<16x32xbf16> to vector<16x32xf32>
    %2 = arith.mulf %1, %1 : vector<16x32xf32>
    %cst = arith.constant dense<0.000000e+00> : vector<16xf32>
    %3 = vector.multi_reduction <add>, %2, %cst [1] : vector<16x32xf32> to vector<16xf32>
    %4 = vector.shape_cast %3 : vector<16xf32> to vector<16x1xf32>
    %cst_1 = arith.constant 3.200000e+01 : f32
    %5 = vector.broadcast %cst_1 : f32 to vector<16x1xf32>
    %6 = arith.divf %4, %5 : vector<16x1xf32>
    %cst_2 = arith.constant 9.99999974E-6 : f32
    %7 = vector.broadcast %cst_2 : f32 to vector<16x1xf32>
    %8 = arith.addf %6, %7 : vector<16x1xf32>
    %9 = math.rsqrt %8 : vector<16x1xf32>
    %10 = vector.broadcast %9 : vector<16x1xf32> to vector<16x32xf32>
    %11 = arith.mulf %1, %10 : vector<16x32xf32>
    %c0_3 = arith.constant 0 : index
    %c0_4 = arith.constant 0 : index
    %12 = vector.load %arg2[%c0_3, %c0_4] : memref<1x32xbf16, #tpu.memory_space<vmem>>, vector<1x32xbf16>
    %13 = arith.truncf %11 : vector<16x32xf32> to vector<16x32xbf16>
    %14 = vector.broadcast %12 : vector<1x32xbf16> to vector<16x32xbf16>
    %15 = arith.mulf %14, %13 : vector<16x32xbf16>
    %c0_5 = arith.constant 0 : index
    %c0_6 = arith.constant 0 : index
    %16 = vector.load %arg3[%c0_5, %c0_6] : memref<16x32xbf16, #tpu.memory_space<vmem>>, vector<16x32xbf16>
    tpu.vector_store %arg3[%c0_5, %c0_6], %15 {strides = array<i32>} : memref<16x32xbf16, #tpu.memory_space<vmem>>, vector<16x32xbf16>,
    return
  }
  func.func @transform_0(%arg0: i32) -> (i32, i32) {
    %c0_i32 = arith.constant 0 : i32
    %c0_i32_0 = arith.constant 0 : i32
    return %arg0, %c0_i32 : i32, i32
  }
  func.func @transform_1(%arg0: i32) -> (i32, i32) {
    %c0_i32 = arith.constant 0 : i32
    %c0_i32_0 = arith.constant 0 : i32
    %c0_i32_1 = arith.constant 0 : i32
    return %c0_i32, %c0_i32_0 : i32, i32
  }
  func.func @transform_2(%arg0: i32) -> (i32, i32) {
    %c0_i32 = arith.constant 0 : i32
    %c0_i32_0 = arith.constant 0 : i32
    return %arg0, %c0_i32 : i32, i32
  }
}

</mosaic_0001>

<llo_original>
// kernel: tpu_custom_call.1
$region0: #{tpu_custom_call.1}
  #allocation0 [shape = 'u32[]', space=smem, size = 0x4, offset = 0x4, fixed_abs, tag = 'smem constant byte address 0x4 - core index']
  #allocation1 [shape = 'u32[72,128]{1,0:T(1,128)}', space=vmem, size = 0x9000, scoped, tag = 'internal scratch']
  %s0 = inlined_call_operand.hbm [shape: bf16[16,32], index: 0, kind: input, shape index: {}]
  %s1 = inlined_call_operand.hbm [shape: bf16[1,32], index: 1, kind: input, shape index: {}]
  %s2 = inlined_call_operand.hbm [shape: bf16[16,32], index: 2, kind: output, shape index: {}]
  %s3 = sld [smem:[#allocation0]]
  $region26: #{tpu_custom_call.1} parent=0
    _
  %s5 = ssub.s32 1, %s3
  %s6 = scalar_select 0, %s5, %s3
  $region1: #{tpu_custom_call.1} parent=0
    #allocation2 [shape = 'u8[4096]{0}', space=vmem, size = 0x1000, scoped, tag = 'input window, operand 0, single buffered']
    #allocation3 [shape = 's32[1]{0}', space=sflag, size = 0x4, scoped, tag = 'scoped memory for tpu_custom_call.1']
    #allocation4 [shape = 's32[1]{0}', space=sflag, size = 0x4, scoped, tag = 'scoped memory for tpu_custom_call.1']
    #allocation5 [shape = 'u8[512]{0}', space=vmem, size = 0x400, scoped, tag = 'input window, operand 1, single buffered']
    #allocation6 [shape = 's32[1]{0}', space=sflag, size = 0x4, scoped, tag = 'scoped memory for tpu_custom_call.1']
    #allocation7 [shape = 'u8[4096]{0}', space=vmem, size = 0x1000, scoped, tag = 'output window, operand 0, single buffered']
    %7 = vsyncpa [#allocation3], 0
    %8 = vsyncpa [#allocation6], 0
    %9 = vsyncpa [#allocation4], 0
    // Predicated region
    $region2: #{tpu_custom_call.1} parent=1 // pred_check
      _
    $region3: #{tpu_custom_call.1} parent=1 // pred_check_branch
      %11 = sbr.rel (0) target = $region5
    $region4: #{tpu_custom_call.1} parent=1 // pred_region
      %13 = vsyncadd [#allocation3], 0
      %s14 = sshll.u32 %s0, 4
      %s15 = int_to_ptr.hbm [resolvable:$true] %s14
      %s16 = sshll.u32 [#allocation2], 4
      %s17 = int_to_ptr.vmem [resolvable:$true] %s16
      %22 = dma.hbm_to_vmem [thread:$0]  %s15, 128, %s17, [#allocation3], 64, 64, 4
    $region5: #{tpu_custom_call.1} parent=1 // pred_fallthru
      _
    // Predicated region
    $region6: #{tpu_custom_call.1} parent=1 // pred_check
      _
    $region7: #{tpu_custom_call.1} parent=1 // pred_check_branch
      %24 = sbr.rel (0) target = $region9
    $region8: #{tpu_custom_call.1} parent=1 // pred_region
      %26 = vsyncadd [#allocation6], 0
      %s28 = sshll.u32 %s1, 4
      %s29 = int_to_ptr.hbm [resolvable:$true] %s28
      %s30 = sshll.u32 [#allocation5], 4
      %s31 = int_to_ptr.vmem [resolvable:$true] %s30
      %33 = dma.hbm_to_vmem [thread:$0]  %s29, 16, %s31, [#allocation6]
    $region9: #{tpu_custom_call.1} parent=1 // pred_fallthru
      _
    // Predicated region
    $region10: #{tpu_custom_call.1} parent=1 // pred_check
      _
    $region11: #{tpu_custom_call.1} parent=1 // pred_check_branch
      %35 = sbr.rel (0) target = $region13
    $region12: #{tpu_custom_call.1} parent=1 // pred_region
      %37 = dma.done [#allocation3], 128
    $region13: #{tpu_custom_call.1} parent=1 // pred_fallthru
      _
    // Predicated region
    $region14: #{tpu_custom_call.1} parent=1 // pred_check
      _
    $region15: #{tpu_custom_call.1} parent=1 // pred_check_branch
      %39 = sbr.rel (0) target = $region17
    $region16: #{tpu_custom_call.1} parent=1 // pred_region
      %41 = dma.done [#allocation6], 16
    $region17: #{tpu_custom_call.1} parent=1 // pred_fallthru
      _
    %v42 = vld [vmem:[#allocation2] sm:$0xf]
    %v43 = vld [vmem:[#allocation2 + $0x4] sm:$0xf]
    %v44 = vunpack.c.l.bf16 %v42
    %v45 = vunpack.c.l.bf16 %v43
    %v46 = vmul.f32 %v44, %v44
    %v47 = vmul.f32 %v45, %v45
    %vm48 = vcmask 261120
    %v49 = vsel %vm48, %v46, 0.0
    %50 = vadd.xlane.f32.xlu0 %v49
    %v51 = vpop.xlane.xlu0 %50
    %v52 = vsel %vm48, %v47, 0.0
    %53 = vadd.xlane.f32.xlu0 %v52
    %v54 = vpop.xlane.xlu0 %53
    %v55 = vrcp.pop 32.0
    %v56 = vmul.f32 32.0, %v55
    %v57 = vsub.f32 1.0, %v56
    %v58 = vmul.f32 %v55, %v57
    %v59 = vadd.f32 %v55, %v58
    %vm60 = vweird.f32 %v55
    %v61 = vsel %vm60, %v55, %v59
    %v62 = vmul.f32 %v51, %v61
    %v63 = vmul.f32 %v54, %v61
    %v64 = vadd.f32 %v62, 1e-05
    %v65 = vadd.f32 %v63, 1e-05
    %v66 = vrsqrt.pop %v64
    %v67 = vmul.f32 %v66, %v64
    %v68 = vmul.f32 %v67, %v66
    %v69 = vmul.f32 0.5, %v68
    %v70 = vsub.f32 1.5, %v69
    %v71 = vmul.f32 %v66, %v70
    %vm72 = vweird.f32 %v64
    %vm73 = vweird.f32 %v66
    %vm74 = vmor %vm72, %vm73
    %v75 = vsel %vm74, %v66, %v71
    %v76 = vrsqrt.pop %v65
    %v77 = vmul.f32 %v76, %v65
    %v78 = vmul.f32 %v77, %v76
    %v79 = vmul.f32 0.5, %v78
    %v80 = vsub.f32 1.5, %v79
    %v81 = vmul.f32 %v76, %v80
    %vm82 = vweird.f32 %v65
    %vm83 = vweird.f32 %v76
    %vm84 = vmor %vm82, %vm83
    %v85 = vsel %vm84, %v76, %v81
    %v86 = vmul.f32 %v44, %v75
    %v87 = vmul.f32 %v45, %v85
    %v88 = vld [vmem:[#allocation5] sm:$0x1]
    %v89 = vpack.c.bf16 %v86, %v86
    %v90 = vpack.c.bf16 %v87, %v87
    %v92 = vpack.i.b16 %v88, %v88
    %v94 = vperm.slane %v92, 0
    %v95 = vunpack.c.l.bf16 %v94
    %v96 = vunpack.c.l.bf16 %v89
    %v97 = vunpack.c.l.bf16 %v90
    %v98 = vmul.f32 %v95, %v96
    %v99 = vmul.f32 %v95, %v97
    %v100 = vpack.c.bf16 %v98, %v98
    %v101 = vpack.c.bf16 %v99, %v99
    %vm102 = vcmask 257024
    %103 = vst.msk [vmem:[#allocation7] sm:$0xf] %vm102, %v100
    %104 = vst.msk [vmem:[#allocation7 + $0x4] sm:$0xf] %vm102, %v101
    // Predicated region
    $region18: #{tpu_custom_call.1} parent=1 // pred_check
      _
    $region19: #{tpu_custom_call.1} parent=1 // pred_check_branch
      %106 = sbr.rel (0) target = $region21
    $region20: #{tpu_custom_call.1} parent=1 // pred_region
      %108 = vsyncadd [#allocation4], 0
      %s109 = sshll.u32 [#allocation7], 4
      %s110 = int_to_ptr.vmem [resolvable:$true] %s109
      %s111 = sshll.u32 %s2, 4
      %s112 = int_to_ptr.hbm [resolvable:$true] %s111
      %117 = dma.vmem_to_hbm [thread:$0]  %s110, 128, %s112, [#allocation4], 64, 64, 4
    $region21: #{tpu_custom_call.1} parent=1 // pred_fallthru
      _
    // Predicated region
    $region22: #{tpu_custom_call.1} parent=1 // pred_check
      _
    $region23: #{tpu_custom_call.1} parent=1 // pred_check_branch
      %119 = sbr.rel (0) target = $region25
    $region24: #{tpu_custom_call.1} parent=1 // pred_region
      %121 = dma.done [#allocation4], 128
    $region25: #{tpu_custom_call.1} parent=1 // pred_fallthru
      _
    %122 = vsyncpa [#allocation3], 1
    %123 = vsyncpa [#allocation6], 1
    %124 = vsyncpa [#allocation4], 1

</llo_original>
